<compile_context>
chip_gen: v5e
topology: v5e:2x2
jax: 0.10.0
libtpu: 0.0.40
codegen_flags: <defaults>
</compile_context>

<pallas_src>
import math

import jax
import jax.numpy as jnp
from jax import lax
from jax.experimental import pallas as pl
from jax.experimental.pallas import tpu as pltpu


_LANE = 128
_TILED_THRESHOLD_BYTES = 2 << 20     # whole-matrix block above this -> tile within matrix
_TILE_CANDIDATES = (512, 256, 128)   # prefer bigger tiles (closer to HBM roofline)


def _round_up(v, m):
    return (v + m - 1) // m * m


def _padded_matrix_bytes(n, dtype):
    """VMEM footprint of one (n, n) matrix after Mosaic (sublane, lane) padding."""
    itemsize = jnp.dtype(dtype).itemsize
    sublane = 8 * max(1, 4 // itemsize)   # 8 for 32-bit, 16 for 16-bit, 32 for 8-bit
    return _round_up(n, sublane) * _round_up(n, _LANE) * itemsize


def _vmem_capacity_bytes():
    """Physical VMEM of the local chip; conservative (v7x) fallback."""
    try:
        return int(pltpu.get_tpu_info().vmem_capacity_bytes)
    except Exception:
        return 64 << 20


def _largest_divisor_le(b, cap):
    cap = int(max(1, min(b, cap)))
    for d in range(cap, 0, -1):
        if b % d == 0:
            return d
    return 1


# ----------------------------------------------------------------------------
# Kernels
# ----------------------------------------------------------------------------
def _go_batched_kernel(x_ref, o_ref):
    # x_ref / o_ref: (TB, n, n) block in VMEM (TB matrices per grid step).
    x = x_ref[...]
    n = x.shape[-1]
    # Mask built once at (1, n, n); jnp.where broadcasts it over the TB axis.
    row = lax.broadcasted_iota(jnp.int32, (1, n, n), 1)
    col = lax.broadcasted_iota(jnp.int32, (1, n, n), 2)
    xt = jnp.swapaxes(x, -2, -1)            # per-matrix transpose of last two dims
    o_ref[...] = jnp.where(row >= col, x, -xt)


def _go_tiled_kernel(ri_ref, rj_ref, wi_ref, wj_ref, x_ref, o_ref):
    # Pair-enumerated tiled path.
    #   x_ref: X[b, ri[k]*T:(ri[k]+1)*T, rj[k]*T:(rj[k]+1)*T]  (ri >= rj)
    #   o_ref: Y[b, wi[k]*T:(wi[k]+1)*T, wj[k]*T:(wj[k]+1)*T]
    # where (wi, wj) is either (ri, rj) or the mirrored (rj, ri).
    # Using GLOBAL offsets of the OUTPUT tile:
    #   row >= col (all true)  -> strictly-lower output tile -> Y = A
    #   row <  col (all false) -> strictly-upper output tile -> Y = -A^T
    #   diagonal tile          -> element-wise where(r >= c, A, -A^T)
    k = pl.program_id(1)
    t = x_ref.shape[-1]
    ro = wi_ref[k]
    co = wj_ref[k]
    row = ro * t + lax.broadcasted_iota(jnp.int32, (1, t, t), 1)
    col = co * t + lax.broadcasted_iota(jnp.int32, (1, t, t), 2)
    a = x_ref[...]
    o_ref[...] = jnp.where(row >= col, a, -jnp.swapaxes(a, -2, -1))


# ----------------------------------------------------------------------------
# pallas_call wrappers
# ----------------------------------------------------------------------------
def _go_batched(xb):
    """Whole-matrix blocks, many matrices per grid step.  xb: (b, n, n)."""
    b, n, _ = xb.shape
    itemsize = jnp.dtype(xb.dtype).itemsize
    pm_bytes = _padded_matrix_bytes(n, xb.dtype)

    cap = _vmem_capacity_bytes()
    # ~4 MiB blocks on v7x (64 MiB VMEM, 3.2 TB/s), ~2 MiB on v5e/v6e.
    target_block_bytes = (4 << 20) if cap <= (64 << 20) else (2 << 20)
    tb_cap = max(1, min(b, target_block_bytes // pm_bytes))
    # Keep at least 2 grid steps so both v7x TensorCores get work.
    if b >= 2:
        tb_cap = min(tb_cap, (b + 1) // 2)

    # Prefer a divisor of b (no wrapper-side pad / slice pass on this
    # HBM-bound op); only pad for pathological factorizations.
    tb = _largest_divisor_le(b, tb_cap)
    x_in = xb
    padded_b = b
    if tb * 4 < tb_cap:
        tb = int(tb_cap)
        padded_b = -(-b // tb) * tb
        x_in = jnp.pad(xb, ((0, padded_b - b), (0, 0), (0, 0)))
    grid_b = padded_b // tb

    # in + out, double-buffered, plus headroom; clamp to physical VMEM.
    vmem_need = 4 * tb * pm_bytes + (4 << 20)
    vmem_limit = int(min(cap - (8 << 20), max(32 << 20, vmem_need)))

    bytes_accessed = int(2 * padded_b * n * n * itemsize)

    out = pl.pallas_call(
        _go_batched_kernel,
        out_shape=jax.ShapeDtypeStruct((padded_b, n, n), xb.dtype),
        grid_spec=pltpu.PrefetchScalarGridSpec(
            num_scalar_prefetch=0,
            grid=(grid_b,),
            in_specs=[pl.BlockSpec((tb, n, n), lambda i: (i, 0, 0))],
            out_specs=pl.BlockSpec((tb, n, n), lambda i: (i, 0, 0)),
        ),
        compiler_params=pltpu.CompilerParams(
            dimension_semantics=("parallel",),
            vmem_limit_bytes=vmem_limit),
        cost_estimate=pl.CostEstimate(
            flops=0, transcendentals=0, bytes_accessed=bytes_accessed),
    )(x_in)

    if padded_b != b:
        out = out[:b]
    return out


def _go_tiled(xb, tile):
    """Pair-enumerated intra-matrix tiling.  xb: (b, n, n), n % tile == 0.

    Each lower-triangular tile pair (i > j) is read once and produces both
    out(i,j) = A and out(j,i) = -A^T on consecutive grid steps (the repeated
    input block index lets Pallas skip the second input DMA).  Diagonal tiles
    take a single masked step.  Total steps = (n/tile)^2.
    """
    b, n, _ = xb.shape
    assert n % tile == 0
    gt = n // tile
    itemsize = jnp.dtype(xb.dtype).itemsize

    ri, rj, wi, wj = [], [], [], []
    for i in range(gt):
        for j in range(i + 1):
            if i == j:
                ri.append(i); rj.append(j); wi.append(i); wj.append(j)
            else:
                # two consecutive steps share the same read tile (i, j)
                ri += [i, i]; rj += [j, j]
                wi += [i, j]; wj += [j, i]
    steps = len(ri)                          # == gt * gt
    ri = jnp.array(ri, dtype=jnp.int32)
    rj = jnp.array(rj, dtype=jnp.int32)
    wi = jnp.array(wi, dtype=jnp.int32)
    wj = jnp.array(wj, dtype=jnp.int32)

    read_tiles = gt * (gt + 1) // 2
    bytes_accessed = int(b * (read_tiles + gt * gt) * tile * tile * itemsize)

    cap = _vmem_capacity_bytes()
    vmem_limit = int(min(cap - (8 << 20), 32 << 20))

    out = pl.pallas_call(
        _go_tiled_kernel,
        out_shape=jax.ShapeDtypeStruct((b, n, n), xb.dtype),
        grid_spec=pltpu.PrefetchScalarGridSpec(
            num_scalar_prefetch=4,
            grid=(b, steps),
            in_specs=[
                pl.BlockSpec((1, tile, tile),
                             lambda bi, k, ri, rj, wi, wj: (bi, ri[k], rj[k])),
            ],
            out_specs=pl.BlockSpec((1, tile, tile),
                                   lambda bi, k, ri, rj, wi, wj: (bi, wi[k], wj[k])),
        ),
        compiler_params=pltpu.CompilerParams(
            dimension_semantics=("parallel", "parallel"),
            vmem_limit_bytes=vmem_limit),
        cost_estimate=pl.CostEstimate(
            flops=0, transcendentals=0, bytes_accessed=bytes_accessed),
    )(ri, rj, wi, wj, xb)
    return out


def _pick_tile(n):
    for t in _TILE_CANDIDATES:
        if n % t == 0 and n // t >= 2:
            return t
    return None


def _go_reference(x):
    # pure-JAX (fused XLA) path: tril(X) - tril(X, -1)^T
    return jnp.tril(x) - jnp.swapaxes(jnp.tril(x, k=-1), -2, -1)


def go_forward(x, *, force_pallas=False):
    """Pallas implementation of go.forward for x of shape (..., n, n)."""
    if x.ndim < 2:
        raise ValueError("weights has dimension < 2")
    if x.shape[-2] != x.shape[-1]:
        raise ValueError("not squared matrix")
    orig_shape = x.shape
    n = orig_shape[-1]

    # Lane-sparse tiny matrices: the fused XLA select already hits the HBM
    # roofline and avoids 8x lane-padded VMEM blocks (worst on v5e).
    if n < _LANE and not force_pallas:
        return _go_reference(x)

    b = math.prod(orig_shape[:-2]) if orig_shape[:-2] else 1
    xb = x.reshape(b, n, n)

    if _padded_matrix_bytes(n, x.dtype) <= _TILED_THRESHOLD_BYTES:
        out = _go_batched(xb)
    else:
        tile = _pick_tile(n)
        if tile is not None:
            out = _go_tiled(xb, tile)
        else:
            # Large n not a multiple of 128: pad to the next multiple of 128,
            # run the tiled path, slice back (whole-matrix blocks at this size
            # would not fit v7x's 64 MiB VMEM when double-buffered).
            n_pad = _round_up(n, _LANE)
            tile = _pick_tile(n_pad)
            xp = jnp.pad(xb, ((0, 0), (0, n_pad - n), (0, n_pad - n)))
            out = _go_tiled(xp, tile)[:, :n, :n]
    return out.reshape(orig_shape)


# ----------------------------------------------------------------------------
# Tests
# ----------------------------------------------------------------------------
if __name__ == "__main__":
    key = jax.random.PRNGKey(0)
    k1, k2, k3 = jax.random.split(key, 3)

    # 1) Small batched square matrices -> batched Pallas path (forced so the
    #    kernel is exercised even though default dispatch would use XLA here).
    x_small = jax.random.normal(k1, (2, 4, 16, 16), dtype=jnp.float32)
    y_small = go_forward(x_small, force_pallas=True)
    jax.block_until_ready(y_small)
    assert y_small.shape == x_small.shape
    assert jnp.allclose(y_small, _go_reference(x_small), atol=1e-6), \
        "batched Pallas path mismatch vs reference"

    # Default dispatch (XLA fusion for n < 128) must agree as well.
    y_small_default = go_forward(x_small)
    assert jnp.allclose(y_small_default, _go_reference(x_small), atol=1e-6)

    # 2) Pair-enumerated tiled Pallas path, exercised directly at a small size
    #    (gt = 2 -> diagonal + off-diagonal pair + mirrored write all covered).
    x_big = jax.random.normal(k2, (2, 256, 256), dtype=jnp.float32)
    y_big = _go_tiled(x_big, tile=128)
    jax.block_until_ready(y_big)
    assert jnp.allclose(y_big, _go_reference(x_big), atol=1e-6), \
        "tiled Pallas path mismatch vs reference"

    # 3) Default dispatch at a lane-aligned size -> batched Pallas path.
    x_mid = jax.random.normal(k3, (3, 128, 128), dtype=jnp.float32)
    y_mid = go_forward(x_mid)
    jax.block_until_ready(y_mid)
    assert y_mid.shape == x_mid.shape
    assert jnp.allclose(y_mid, _go_reference(x_mid), atol=1e-6), \
        "default dispatch mismatch vs reference"

    # Sanity: off-diagonal part is skew-symmetric (in_lie_algebra-style check).
    diag = jnp.diagonal(y_small, axis1=-2, axis2=-1)
    off = y_small - jnp.eye(16, dtype=y_small.dtype) * diag[..., None, :]
    assert jnp.allclose(jnp.swapaxes(off, -2, -1), -off, atol=1e-5)

    print("KERNEL_OK")
</pallas_src>

<mosaic_0001>
module attributes {stable_mosaic.version = 11 : i64} {
  func.func @_go_batched_kernel(%arg0: i32, %arg1: memref<4x16x16xf32, #tpu.memory_space<vmem>>, %arg2: memref<4x16x16xf32, #tpu.memory_space<vmem>>) attributes {dimension_semantics = [#tpu.dimension_semantics<parallel>], iteration_bounds = array<i64: 2>, scalar_prefetch = 0 : i64, scratch_operands = 0 : i64, tpu.core_type = #tpu.core_type<tc>, window_params = [{transform_indices = @transform_0, window_bounds = array<i64: 4, 16, 16>}, {transform_indices = @transform_1, window_bounds = array<i64: 4, 16, 16>}]} {
    %c0 = arith.constant 0 : index
    %c0_0 = arith.constant 0 : index
    %c0_1 = arith.constant 0 : index
    %0 = vector.load %arg1[%c0, %c0_0, %c0_1] : memref<4x16x16xf32, #tpu.memory_space<vmem>>, vector<4x16x16xf32>
    %1 = tpu.iota {dimensions = array<i32: 1>} : vector<1x16x16xi32>
    %2 = tpu.iota {dimensions = array<i32: 2>} : vector<1x16x16xi32>
    %3 = tpu.transpose %0, [0, 2, 1] : vector<4x16x16xf32> -> vector<4x16x16xf32>
    %4 = arith.cmpi sge, %1, %2 : vector<1x16x16xi32>
    %cst = arith.constant 0.000000e+00 : f32
    %5 = vector.broadcast %cst : f32 to vector<4x16x16xf32>
    %6 = arith.subf %5, %3 : vector<4x16x16xf32>
    %7 = vector.shape_cast %4 : vector<1x16x16xi1> to vector<1x16x16xi1>
    %8 = vector.broadcast %7 : vector<1x16x16xi1> to vector<4x16x16xi1>
    %9 = arith.select %8, %0, %6 : vector<4x16x16xi1>, vector<4x16x16xf32>
    %c0_2 = arith.constant 0 : index
    %c0_3 = arith.constant 0 : index
    %c0_4 = arith.constant 0 : index
    %10 = vector.load %arg2[%c0_2, %c0_3, %c0_4] : memref<4x16x16xf32, #tpu.memory_space<vmem>>, vector<4x16x16xf32>
    tpu.vector_store %arg2[%c0_2, %c0_3, %c0_4], %9 {strides = array<i32>} : memref<4x16x16xf32, #tpu.memory_space<vmem>>, vector<4x16x16xf32>,
    return
  }
  func.func @transform_0(%arg0: i32) -> (i32, i32, i32) {
    %c0_i32 = arith.constant 0 : i32
    %c0_i32_0 = arith.constant 0 : i32
    %c0_i32_1 = arith.constant 0 : i32
    return %arg0, %c0_i32, %c0_i32_0 : i32, i32, i32
  }
  func.func @transform_1(%arg0: i32) -> (i32, i32, i32) {
    %c0_i32 = arith.constant 0 : i32
    %c0_i32_0 = arith.constant 0 : i32
    %c0_i32_1 = arith.constant 0 : i32
    return %arg0, %c0_i32, %c0_i32_0 : i32, i32, i32
  }
}

</mosaic_0001>

<llo_original>
// kernel: tpu_custom_call.1
$region0: #{tpu_custom_call.1}
  #allocation0 [shape = 'u32[]', space=smem, size = 0x4, offset = 0x4, fixed_abs, tag = 'smem constant byte address 0x4 - core index']
  #allocation1 [shape = 'u32[72,128]{1,0:T(1,128)}', space=vmem, size = 0x9000, scoped, tag = 'internal scratch']
  %s0 = inlined_call_operand.hbm [shape: f32[8,16,16], index: 0, kind: input, shape index: {}]
  %s1 = inlined_call_operand.hbm [shape: f32[8,16,16], index: 1, kind: output, shape index: {}]
  %s2 = sld [smem:[#allocation0]]
  $region41: #{tpu_custom_call.1} parent=0
    _
  %s4 = ssub.s32 1, %s2
  %s5 = scalar_select 0, %s4, %s2
  $region1: #{tpu_custom_call.1} parent=0
    #allocation2 [shape = 'u8[65536]{0}', space=vmem, size = 0x10000, scoped, tag = 'input window, operand 0']
    #allocation3 [shape = 's32[2]{0}', space=sflag, size = 0x8, scoped, tag = 'scoped memory for tpu_custom_call.1']
    #allocation4 [shape = 's32[2]{0}', space=sflag, size = 0x8, scoped, tag = 'scoped memory for tpu_custom_call.1']
    #allocation5 [shape = 'u8[65536]{0}', space=vmem, size = 0x10000, scoped, tag = 'output window, operand 0']
    %6 = vsyncpa [#allocation3], 0
    %s7 = scalar_lea.sflag [#allocation3], 1
    %8 = vsyncpa %s7, 0
    %9 = vsyncpa [#allocation4], 0
    %s10 = scalar_lea.sflag [#allocation4], 1
    %11 = vsyncpa %s10, 0
    loop: start=0, step=1, limit=4
    $region2: #{tpu_custom_call.1} parent=1 // loop_pre_header
      _
    $region3: #{tpu_custom_call.1} parent=1 // loop_header
      %s13 = sphi 0, %s17
      %p14 = scmp.ge.s32.totalorder %s13, 4
      %s23 = sphi 0, %s25
      %s26 = sphi 0, %s23
      %s27 = sphi 0, %s26
      %s43 = sphi 0, %s27
      %s49 = sphi 0, %s51
      %s52 = sphi 0, %s49
      %s53 = sphi 0, %s52
      %s69 = sphi 0, %s53
    $region4: #{tpu_custom_call.1} parent=1 // loop_header_branch
      %16 = sbr.rel (%p14) target = $region8
    $region5: #{tpu_custom_call.1} parent=1 // loop_body
      %s18 = ssub.s32 %s13, 1
      %s19 = ssub.s32 %s13, 2
      %s20 = sadd.s32 %s13, 1
      %s21 = ssub.s32 %s13, %s20
      %p22 = scmp.eq.s32.totalorder %s21, 0
      %s24 = sadd.s32 %s23, 1
      %s25 = scalar_select %p22, %s23, %s24
      %p28 = pneg %p22
      %p29 = scmp.eq.s32.totalorder %s13, 1
      %p30 = por %p28, %p29
      %p31 = scmp.ne.s32.totalorder %s23, %s26
      %p32 = scmp.eq.s32.totalorder %s13, 0
      %p33 = por %p31, %p32
      %p34 = scmp.ne.s32.totalorder %s23, %s26
      %p35 = scmp.eq.s32.totalorder %s18, 1
      %p36 = por %p34, %p35
      %p37 = scmp.ne.s32.totalorder %s26, %s27
      %p38 = scmp.eq.s32.totalorder %s18, 0
      %p39 = por %p37, %p38
      %p40 = scmp.ne.s32.totalorder %s26, %s27
      %p41 = scmp.eq.s32.totalorder %s19, 1
      %p42 = por %p40, %p41
      %p44 = scmp.ne.s32.totalorder %s27, %s43
      %p45 = scmp.eq.s32.totalorder %s19, 0
      %p46 = por %p44, %p45
      %s47 = ssub.s32 %s13, %s20
      %p48 = scmp.eq.s32.totalorder %s47, 0
      %s50 = sadd.s32 %s49, 1
      %s51 = scalar_select %p48, %s49, %s50
      %p54 = pneg %p48
      %p55 = scmp.eq.s32.totalorder %s13, 1
      %p56 = por %p54, %p55
      %p57 = scmp.ne.s32.totalorder %s49, %s52
      %p58 = scmp.eq.s32.totalorder %s13, 0
      %p59 = por %p57, %p58
      %p60 = scmp.ne.s32.totalorder %s49, %s52
      %p61 = scmp.eq.s32.totalorder %s18, 1
      %p62 = por %p60, %p61
      %p63 = scmp.ne.s32.totalorder %s52, %s53
      %p64 = scmp.eq.s32.totalorder %s18, 0
      %p65 = por %p63, %p64
      %p66 = scmp.ne.s32.totalorder %s52, %s53
      %p67 = scmp.eq.s32.totalorder %s19, 1
      %p68 = por %p66, %p67
      %p70 = scmp.ne.s32.totalorder %s53, %s69
      %p71 = scmp.eq.s32.totalorder %s19, 0
      %p72 = por %p70, %p71
      %p73 = scmp.le.s32.totalorder 1, %s13
      %p74 = scmp.lt.s32.totalorder %s13, 3
      %p75 = pnand %p73, %p74
      %p76 = pneg %p75
      // Predicated region
      $region9: #{tpu_custom_call.1} parent=5 // pred_check
        _
      $region10: #{tpu_custom_call.1} parent=5 // pred_check_branch
        %78 = sbr.rel (%p75) target = $region12
      $region11: #{tpu_custom_call.1} parent=5 // pred_region
        %s79 = ssub.s32 %s13, 1
      $region12: #{tpu_custom_call.1} parent=5 // pred_fallthru
        _
      %p80 = scmp.lt.s32.totalorder %s13, 2
      // Predicated region
      $region13: #{tpu_custom_call.1} parent=5 // pred_check
        %p81 = pneg %p80
      $region14: #{tpu_custom_call.1} parent=5 // pred_check_branch
        %83 = sbr.rel (%p81) target = $region16
      $region15: #{tpu_custom_call.1} parent=5 // pred_region
        // Predicated region
        $region17: #{tpu_custom_call.1} parent=15 // pred_check
          %p84 = pneg %p33
        $region18: #{tpu_custom_call.1} parent=15 // pred_check_branch
          %86 = sbr.rel (%p84) target = $region20
        $region19: #{tpu_custom_call.1} parent=15 // pred_region
          %s87 = sand.u32 %s23, 1
          %s88 = scalar_lea.sflag [#allocation3], %s87
          %s89 = sand.u32 %s23, 1
          %s90 = smul.addr %s89, 64
          %s91 = scalar_lea.vmem [#allocation2], %s90
          %s92 = smul.u32 4, %s13
          %94 = vsyncadd %s88, 0
          %s95 = smul.addr %s92, 2
          %s96 = smul.addr %s95, 8
          %s97 = scalar_lea.hbm %s0, %s96
          %s98 = sshll.u32 %s97, 4
          %s99 = int_to_ptr.hbm [resolvable:$true] %s98
          %s100 = sshll.u32 %s91, 4
          %s101 = int_to_ptr.vmem [resolvable:$true] %s100
          %106 = dma.hbm_to_vmem [thread:$0]  %s99, 1024, %s101, %s88, 128, 128, 8
        $region20: #{tpu_custom_call.1} parent=15 // pred_fallthru
          _
      $region16: #{tpu_custom_call.1} parent=5 // pred_fallthru
        _
      %p107 = scmp.le.s32.totalorder 1, %s13
      %p108 = scmp.lt.s32.totalorder %s13, 3
      %p109 = pnand %p107, %p108
      %p110 = pneg %p109
      // Predicated region
      $region21: #{tpu_custom_call.1} parent=5 // pred_check
        _
      $region22: #{tpu_custom_call.1} parent=5 // pred_check_branch
        %112 = sbr.rel (%p109) target = $region24
      $region23: #{tpu_custom_call.1} parent=5 // pred_region
        %s113 = ssub.s32 %s13, 1
        %s114 = sand.u32 %s26, 1
        %s115 = scalar_lea.sflag [#allocation3], %s114
        %s116 = sand.u32 %s26, 1
        %s117 = smul.addr %s116, 64
        %s118 = scalar_lea.vmem [#allocation2], %s117
        // Predicated region
        $region25: #{tpu_custom_call.1} parent=23 // pred_check
          %p119 = pneg %p39
        $region26: #{tpu_custom_call.1} parent=23 // pred_check_branch
          %121 = sbr.rel (%p119) target = $region28
        $region27: #{tpu_custom_call.1} parent=23 // pred_region
          %123 = dma.done %s115, 1024
        $region28: #{tpu_custom_call.1} parent=23 // pred_fallthru
          _
        %s124 = sand.u32 %s26, 1
        %s125 = scalar_lea.sflag [#allocation3], %s124
        %s126 = sand.u32 %s26, 1
        %s127 = smul.addr %s126, 64
        %s128 = scalar_lea.vmem [#allocation2], %s127
        %p129 = pneg %p39
        %p130 = pneg %p36
        %p131 = pneg %p65
        %p132 = pneg %p62
        %s133 = sand.u32 %s52, 1
        %s134 = scalar_lea.sflag [#allocation4], %s133
        %s135 = sand.u32 %s52, 1
        %s136 = smul.addr %s135, 64
        %s137 = scalar_lea.vmem [#allocation5], %s136
        %s138 = smul.u32 4, %s18
        %s139 = smul.u32 4, %s18
        %v140 = vld [vmem:[%s118] sm:$0xff]
        %v141 = vld [vmem:[%s118 + $0x8] sm:$0xff]
        %v142 = vld [vmem:[%s118 + $0x10] sm:$0xff]
        %v143 = vld [vmem:[%s118 + $0x18] sm:$0xff]
        %v144 = vld [vmem:[%s118 + $0x20] sm:$0xff]
        %v145 = vld [vmem:[%s118 + $0x28] sm:$0xff]
        %v146 = vld [vmem:[%s118 + $0x30] sm:$0xff]
        %v147 = vld [vmem:[%s118 + $0x38] sm:$0xff]
        %v148 = vlaneseq
        %v149 = vshrl.u32 %v148, 7
        %v150 = vadd.s32 %v149, 8
        %v151 = vlaneseq
        %v152 = vand.u32 %v151, 127
        %153 = vxpose.xlu0.b32.start [1/16] %v140, 128
        %154 = vxpose.xlu0.b32.cont [2/16] %v141, 128
        %155 = vxpose.xlu0.b32.cont [3/16] 0.0, 128
        %156 = vxpose.xlu0.b32.cont [4/16] 0.0, 128
        %157 = vxpose.xlu0.b32.cont [5/16] 0.0, 128
        %158 = vxpose.xlu0.b32.cont [6/16] 0.0, 128
        %159 = vxpose.xlu0.b32.cont [7/16] 0.0, 128
        %160 = vxpose.xlu0.b32.cont [8/16] 0.0, 128
        %161 = vxpose.xlu0.b32.cont [9/16] 0.0, 128
        %162 = vxpose.xlu0.b32.cont [10/16] 0.0, 128
        %163 = vxpose.xlu0.b32.cont [11/16] 0.0, 128
        %164 = vxpose.xlu0.b32.cont [12/16] 0.0, 128
        %165 = vxpose.xlu0.b32.cont [13/16] 0.0, 128
        %166 = vxpose.xlu0.b32.cont [14/16] 0.0, 128
        %167 = vxpose.xlu0.b32.cont [15/16] 0.0, 128
        %168 = vxpose.xlu0.b32.end [16/16] 0.0, 128
        %v169 = vpop.trf.xlu0
        %v170 = vpop.trf.xlu0
        %v171 = vpop.trf.xlu0
        %v172 = vpop.trf.xlu0
        %v173 = vpop.trf.xlu0
        %v174 = vpop.trf.xlu0
        %v175 = vpop.trf.xlu0
        %v176 = vpop.trf.xlu0
        %v177 = vpop.trf.xlu0
        %v178 = vpop.trf.xlu0
        %v179 = vpop.trf.xlu0
        %v180 = vpop.trf.xlu0
        %v181 = vpop.trf.xlu0
        %v182 = vpop.trf.xlu0
        %v183 = vpop.trf.xlu0
        %v184 = vpop.trf.xlu0
        %185 = vxpose.xlu0.b32.start [1/16] %v142, 128
        %186 = vxpose.xlu0.b32.cont [2/16] %v143, 128
        %187 = vxpose.xlu0.b32.cont [3/16] 0.0, 128
        %188 = vxpose.xlu0.b32.cont [4/16] 0.0, 128
        %189 = vxpose.xlu0.b32.cont [5/16] 0.0, 128
        %190 = vxpose.xlu0.b32.cont [6/16] 0.0, 128
        %191 = vxpose.xlu0.b32.cont [7/16] 0.0, 128
        %192 = vxpose.xlu0.b32.cont [8/16] 0.0, 128
        %193 = vxpose.xlu0.b32.cont [9/16] 0.0, 128
        %194 = vxpose.xlu0.b32.cont [10/16] 0.0, 128
        %195 = vxpose.xlu0.b32.cont [11/16] 0.0, 128
        %196 = vxpose.xlu0.b32.cont [12/16] 0.0, 128
        %197 = vxpose.xlu0.b32.cont [13/16] 0.0, 128
        %198 = vxpose.xlu0.b32.cont [14/16] 0.0, 128
        %199 = vxpose.xlu0.b32.cont [15/16] 0.0, 128
        %200 = vxpose.xlu0.b32.end [16/16] 0.0, 128
        %v201 = vpop.trf.xlu0
        %v202 = vpop.trf.xlu0
        %v203 = vpop.trf.xlu0
        %v204 = vpop.trf.xlu0
        %v205 = vpop.trf.xlu0
        %v206 = vpop.trf.xlu0
        %v207 = vpop.trf.xlu0
        %v208 = vpop.trf.xlu0
        %v209 = vpop.trf.xlu0
        %v210 = vpop.trf.xlu0
        %v211 = vpop.trf.xlu0
        %v212 = vpop.trf.xlu0
        %v213 = vpop.trf.xlu0
        %v214 = vpop.trf.xlu0
        %v215 = vpop.trf.xlu0
        %v216 = vpop.trf.xlu0
        %217 = vxpose.xlu0.b32.start [1/16] %v144, 128
        %218 = vxpose.xlu0.b32.cont [2/16] %v145, 128
        %219 = vxpose.xlu0.b32.cont [3/16] 0.0, 128
        %220 = vxpose.xlu0.b32.cont [4/16] 0.0, 128
        %221 = vxpose.xlu0.b32.cont [5/16] 0.0, 128
        %222 = vxpose.xlu0.b32.cont [6/16] 0.0, 128
        %223 = vxpose.xlu0.b32.cont [7/16] 0.0, 128
        %224 = vxpose.xlu0.b32.cont [8/16] 0.0, 128
        %225 = vxpose.xlu0.b32.cont [9/16] 0.0, 128
        %226 = vxpose.xlu0.b32.cont [10/16] 0.0, 128
        %227 = vxpose.xlu0.b32.cont [11/16] 0.0, 128
        %228 = vxpose.xlu0.b32.cont [12/16] 0.0, 128
        %229 = vxpose.xlu0.b32.cont [13/16] 0.0, 128
        %230 = vxpose.xlu0.b32.cont [14/16] 0.0, 128
        %231 = vxpose.xlu0.b32.cont [15/16] 0.0, 128
        %232 = vxpose.xlu0.b32.end [16/16] 0.0, 128
        %v233 = vpop.trf.xlu0
        %v234 = vpop.trf.xlu0
        %v235 = vpop.trf.xlu0
        %v236 = vpop.trf.xlu0
        %v237 = vpop.trf.xlu0
        %v238 = vpop.trf.xlu0
        %v239 = vpop.trf.xlu0
        %v240 = vpop.trf.xlu0
        %v241 = vpop.trf.xlu0
        %v242 = vpop.trf.xlu0
        %v243 = vpop.trf.xlu0
        %v244 = vpop.trf.xlu0
        %v245 = vpop.trf.xlu0
        %v246 = vpop.trf.xlu0
        %v247 = vpop.trf.xlu0
        %v248 = vpop.trf.xlu0
        %249 = vxpose.xlu0.b32.start [1/16] %v146, 128
        %250 = vxpose.xlu0.b32.cont [2/16] %v147, 128
        %251 = vxpose.xlu0.b32.cont [3/16] 0.0, 128
        %252 = vxpose.xlu0.b32.cont [4/16] 0.0, 128
        %253 = vxpose.xlu0.b32.cont [5/16] 0.0, 128
        %254 = vxpose.xlu0.b32.cont [6/16] 0.0, 128
        %255 = vxpose.xlu0.b32.cont [7/16] 0.0, 128
        %256 = vxpose.xlu0.b32.cont [8/16] 0.0, 128
        %257 = vxpose.xlu0.b32.cont [9/16] 0.0, 128
        %258 = vxpose.xlu0.b32.cont [10/16] 0.0, 128
        %259 = vxpose.xlu0.b32.cont [11/16] 0.0, 128
        %260 = vxpose.xlu0.b32.cont [12/16] 0.0, 128
        %261 = vxpose.xlu0.b32.cont [13/16] 0.0, 128
        %262 = vxpose.xlu0.b32.cont [14/16] 0.0, 128
        %263 = vxpose.xlu0.b32.cont [15/16] 0.0, 128
        %264 = vxpose.xlu0.b32.end [16/16] 0.0, 128
        %v265 = vpop.trf.xlu0
        %v266 = vpop.trf.xlu0
        %v267 = vpop.trf.xlu0
        %v268 = vpop.trf.xlu0
        %v269 = vpop.trf.xlu0
        %v270 = vpop.trf.xlu0
        %v271 = vpop.trf.xlu0
        %v272 = vpop.trf.xlu0
        %v273 = vpop.trf.xlu0
        %v274 = vpop.trf.xlu0
        %v275 = vpop.trf.xlu0
        %v276 = vpop.trf.xlu0
        %v277 = vpop.trf.xlu0
        %v278 = vpop.trf.xlu0
        %v279 = vpop.trf.xlu0
        %v280 = vpop.trf.xlu0
        %vm281 = vcmp.ge.s32.totalorder %v149, %v152
        %vm282 = vcmp.ge.s32.totalorder %v150, %v152
        %v283 = vsub.f32 0.0, %v169
        %v284 = vsub.f32 0.0, %v170
        %v285 = vsub.f32 0.0, %v201
        %v286 = vsub.f32 0.0, %v202
        %v287 = vsub.f32 0.0, %v233
        %v288 = vsub.f32 0.0, %v234
        %v289 = vsub.f32 0.0, %v265
        %v290 = vsub.f32 0.0, %v266
        %v291 = vsel %vm281, 1, 0
        %v292 = vsel %vm282, 1, 0
        %vm293 = vcmp.eq.s32.totalorder %v291, 1
        %vm294 = vcmp.eq.s32.totalorder %v292, 1
        %v295 = vsel %vm293, %v140, %v283
        %v296 = vsel %vm294, %v141, %v284
        %v297 = vsel %vm293, %v142, %v285
        %v298 = vsel %vm294, %v143, %v286
        %v299 = vsel %vm293, %v144, %v287
        %v300 = vsel %vm294, %v145, %v288
        %v301 = vsel %vm293, %v146, %v289
        %v302 = vsel %vm294, %v147, %v290
        %vm303 = vcmask 130048
        %304 = vst.msk [vmem:[%s137] sm:$0xff] %vm303, %v295
        %305 = vst.msk [vmem:[%s137 + $0x8] sm:$0xff] %vm303, %v296
        %306 = vst.msk [vmem:[%s137 + $0x10] sm:$0xff] %vm303, %v297
        %307 = vst.msk [vmem:[%s137 + $0x18] sm:$0xff] %vm303, %v298
        %308 = vst.msk [vmem:[%s137 + $0x20] sm:$0xff] %vm303, %v299
        %309 = vst.msk [vmem:[%s137 + $0x28] sm:$0xff] %vm303, %v300
        %310 = vst.msk [vmem:[%s137 + $0x30] sm:$0xff] %vm303, %v301
        %311 = vst.msk [vmem:[%s137 + $0x38] sm:$0xff] %vm303, %v302
        %s312 = sand.u32 %s52, 1
        %s313 = scalar_lea.sflag [#allocation4], %s312
        %s314 = sand.u32 %s52, 1
        %s315 = smul.addr %s314, 64
        %s316 = scalar_lea.vmem [#allocation5], %s315
        // Predicated region
        $region29: #{tpu_custom_call.1} parent=23 // pred_check
          %p317 = pneg %p62
        $region30: #{tpu_custom_call.1} parent=23 // pred_check_branch
          %319 = sbr.rel (%p317) target = $region32
        $region31: #{tpu_custom_call.1} parent=23 // pred_region
          %s320 = smul.u32 4, %s18
          %322 = vsyncadd %s313, 0
          %s323 = smul.addr %s320, 2
          %s324 = smul.addr %s323, 8
          %s325 = scalar_lea.hbm %s1, %s324
          %s326 = sshll.u32 %s316, 4
          %s327 = int_to_ptr.vmem [resolvable:$true] %s326
          %s328 = sshll.u32 %s325, 4
          %s329 = int_to_ptr.hbm [resolvable:$true] %s328
          %334 = dma.vmem_to_hbm [thread:$0]  %s327, 1024, %s329, %s313, 128, 128, 8
        $region32: #{tpu_custom_call.1} parent=23 // pred_fallthru
          _
      $region24: #{tpu_custom_call.1} parent=5 // pred_fallthru
        _
      %p335 = scmp.le.s32.totalorder 2, %s13
      // Predicated region
      $region33: #{tpu_custom_call.1} parent=5 // pred_check
        %p336 = pneg %p335
      $region34: #{tpu_custom_call.1} parent=5 // pred_check_branch
        %338 = sbr.rel (%p336) target = $region36
      $region35: #{tpu_custom_call.1} parent=5 // pred_region
        %s339 = ssub.s32 %s13, 2
        // Predicated region
        $region37: #{tpu_custom_call.1} parent=35 // pred_check
          %p340 = pneg %p68
        $region38: #{tpu_custom_call.1} parent=35 // pred_check_branch
          %342 = sbr.rel (%p340) target = $region40
        $region39: #{tpu_custom_call.1} parent=35 // pred_region
          %s343 = sand.u32 %s53, 1
          %s344 = scalar_lea.sflag [#allocation4], %s343
          %s345 = sand.u32 %s53, 1
          %s346 = smul.addr %s345, 64
          %s347 = scalar_lea.vmem [#allocation5], %s346
          %349 = dma.done %s344, 1024
        $region40: #{tpu_custom_call.1} parent=35 // pred_fallthru
          _
      $region36: #{tpu_custom_call.1} parent=5 // pred_fallthru
        _
    $region6: #{tpu_custom_call.1} parent=1 // loop_footer
      %s17 = sadd.s32 1, %s13
    $region7: #{tpu_custom_call.1} parent=1 // loop_footer_branch
      %12 = sbr.rel target = $region3
    $region8: #{tpu_custom_call.1} parent=1 // loop_exit
      _
    %350 = vsyncpa [#allocation3], 1
    %s351 = scalar_lea.sflag [#allocation3], 1
    %352 = vsyncpa %s351, 1
    %353 = vsyncpa [#allocation4], 1
    %s354 = scalar_lea.sflag [#allocation4], 1
    %355 = vsyncpa %s354, 1

</llo_original>
